<compile_context>
chip_gen: v7x
topology: tpu7x:2x2x1
jax: 0.10.0
libtpu: 0.0.40
codegen_flags: <defaults>
</compile_context>

<pallas_src>
import jax
import jax.numpy as jnp
from jax.experimental import pallas as pl
from jax.experimental.pallas import tpu as pltpu

SUB = 8      # f32 minimum sublane tile
LANE = 128   # lane width


def _make_kernel(k_dim: int, n_dim: int):
    """Build an unrolled VPU broadcast-MAC kernel for the (tiny) static K/N."""

    def kernel(x1_ref, x2_ref, x3f_ref, o_ref):
        x1 = x1_ref[...]     # (8,128), data in [0:m, 0:k]
        x2 = x2_ref[...]     # (8,128), data in [0:k, 0:n]
        x3f = x3f_ref[...]   # (8,128), holds (2*x3 + I) in [0:n, 0:p]

        # v1 = x1 @ x2  via outer-product accumulation (pure VPU, K=k_dim terms)
        v1 = x1[:, 0:1] * x2[0:1, :]
        for kk in range(1, k_dim):
            v1 = v1 + x1[:, kk:kk + 1] * x2[kk:kk + 1, :]

        # out = v2 + v1 = v1 @ (2*x3 + I)  via the same broadcast-MAC
        out = v1[:, 0:1] * x3f[0:1, :]
        for kk in range(1, n_dim):
            out = out + v1[:, kk:kk + 1] * x3f[kk:kk + 1, :]

        o_ref[...] = out.astype(o_ref.dtype)

    return kernel


def _forward(x1, x2, x3, inp=None, v0=None):
    # inp / v0 are unused by the torch forward; ignored here.
    m, k = x1.shape
    k2, n = x2.shape
    n2, p = x3.shape
    assert k2 == k and n2 == n and n == p, "shapes must chain and n == p (for v2 + v1)"
    # Broadcast-MAC layout limits: rows of x2 / x3 live in the 8 sublanes of an
    # (8,128) tile; output columns live in 128 lanes.  Fail loudly otherwise.
    assert m <= SUB and k <= SUB and n <= SUB and p <= LANE, (
        "kernel is specialized for tiny (<=8 x <=8) operands")

    f32 = jnp.float32
    x1p = jnp.zeros((SUB, LANE), f32).at[:m, :k].set(x1.astype(f32))
    x2p = jnp.zeros((SUB, LANE), f32).at[:k, :n].set(x2.astype(f32))
    # Algebraic fusion of "+ v1" into the second MAC chain: x3' = 2*x3 + I.
    # Valid because v1 is exactly zero outside its (m, n) corner.
    x3f = 2.0 * x3.astype(f32) + jnp.eye(n, dtype=f32)
    x3p = jnp.zeros((SUB, LANE), f32).at[:n, :p].set(x3f)

    spec = pl.BlockSpec((SUB, LANE), lambda: (0, 0))
    tile_bytes = SUB * LANE * 4

    out_padded = pl.pallas_call(
        _make_kernel(k, n),
        out_shape=jax.ShapeDtypeStruct((SUB, LANE), f32),
        in_specs=[spec, spec, spec],
        out_specs=spec,
        compiler_params=pltpu.CompilerParams(
            # Let XLA fuse the zero-pad producers into the pallas operands
            # instead of materializing them in HBM first.
            allow_input_fusion=[True, True, True],
        ),
        cost_estimate=pl.CostEstimate(
            flops=2 * (m * k * n + m * n * p),
            transcendentals=0,
            bytes_accessed=4 * tile_bytes,
        ),
    )(x1p, x2p, x3p)

    return out_padded[:m, :p]


# jit the whole wrapper so the pads, the (2*x3 + I) fold and the final slice
# fuse around the pallas_call instead of being separate HBM-touching XLA ops.
model_forward = jax.jit(_forward)


def _reference(x1, x2, x3):
    v1 = x1 @ x2
    v3 = x1 @ x2
    v2 = (v1 + v3) @ x3
    return v2 + v1


if __name__ == "__main__":
    key = jax.random.PRNGKey(0)
    k1, k2, k3, k4, k5 = jax.random.split(key, 5)
    x1 = jax.random.normal(k1, (3, 3), dtype=jnp.float32)
    x2 = jax.random.normal(k2, (3, 3), dtype=jnp.float32)
    x3 = jax.random.normal(k3, (3, 3), dtype=jnp.float32)
    inp = jax.random.normal(k4, (3, 3), dtype=jnp.float32)  # unused by forward
    v0 = jax.random.normal(k5, (3, 3), dtype=jnp.float32)   # unused by forward

    out = model_forward(x1, x2, x3, inp, v0)
    out = jax.block_until_ready(out)

    ref = _reference(x1, x2, x3)
    assert out.shape == (3, 3)
    assert jnp.allclose(out, ref, atol=1e-4, rtol=1e-4)
    print("KERNEL_OK")
</pallas_src>

<mosaic_0001>
module attributes {stable_mosaic.version = 11 : i64} {
  func.func @kernel(%arg0: memref<8x128xf32, #tpu.memory_space<vmem>>, %arg1: memref<8x128xf32, #tpu.memory_space<vmem>>, %arg2: memref<8x128xf32, #tpu.memory_space<vmem>>, %arg3: memref<8x128xf32, #tpu.memory_space<vmem>>) attributes {dimension_semantics = [], scalar_prefetch = 0 : i64, scratch_operands = 0 : i64, tpu.core_type = #tpu.core_type<tc>} {
    %c0 = arith.constant 0 : index
    %c0_0 = arith.constant 0 : index
    %0 = vector.load %arg0[%c0, %c0_0] : memref<8x128xf32, #tpu.memory_space<vmem>>, vector<8x128xf32>
    %c0_1 = arith.constant 0 : index
    %c0_2 = arith.constant 0 : index
    %1 = vector.load %arg1[%c0_1, %c0_2] : memref<8x128xf32, #tpu.memory_space<vmem>>, vector<8x128xf32>
    %c0_3 = arith.constant 0 : index
    %c0_4 = arith.constant 0 : index
    %2 = vector.load %arg2[%c0_3, %c0_4] : memref<8x128xf32, #tpu.memory_space<vmem>>, vector<8x128xf32>
    %3 = vector.extract_strided_slice %0 {offsets = [0, 0], sizes = [8, 1], strides = [1, 1]} : vector<8x128xf32> to vector<8x1xf32>
    %4 = vector.extract_strided_slice %1 {offsets = [0, 0], sizes = [1, 128], strides = [1, 1]} : vector<8x128xf32> to vector<1x128xf32>
    %5 = vector.broadcast %3 : vector<8x1xf32> to vector<8x128xf32>
    %6 = vector.broadcast %4 : vector<1x128xf32> to vector<8x128xf32>
    %7 = arith.mulf %5, %6 : vector<8x128xf32>
    %8 = vector.extract_strided_slice %0 {offsets = [0, 1], sizes = [8, 1], strides = [1, 1]} : vector<8x128xf32> to vector<8x1xf32>
    %9 = vector.extract_strided_slice %1 {offsets = [1, 0], sizes = [1, 128], strides = [1, 1]} : vector<8x128xf32> to vector<1x128xf32>
    %10 = vector.broadcast %8 : vector<8x1xf32> to vector<8x128xf32>
    %11 = vector.broadcast %9 : vector<1x128xf32> to vector<8x128xf32>
    %12 = arith.mulf %10, %11 : vector<8x128xf32>
    %13 = arith.addf %7, %12 : vector<8x128xf32>
    %14 = vector.extract_strided_slice %0 {offsets = [0, 2], sizes = [8, 1], strides = [1, 1]} : vector<8x128xf32> to vector<8x1xf32>
    %15 = vector.extract_strided_slice %1 {offsets = [2, 0], sizes = [1, 128], strides = [1, 1]} : vector<8x128xf32> to vector<1x128xf32>
    %16 = vector.broadcast %14 : vector<8x1xf32> to vector<8x128xf32>
    %17 = vector.broadcast %15 : vector<1x128xf32> to vector<8x128xf32>
    %18 = arith.mulf %16, %17 : vector<8x128xf32>
    %19 = arith.addf %13, %18 : vector<8x128xf32>
    %20 = vector.extract_strided_slice %19 {offsets = [0, 0], sizes = [8, 1], strides = [1, 1]} : vector<8x128xf32> to vector<8x1xf32>
    %21 = vector.extract_strided_slice %2 {offsets = [0, 0], sizes = [1, 128], strides = [1, 1]} : vector<8x128xf32> to vector<1x128xf32>
    %22 = vector.broadcast %20 : vector<8x1xf32> to vector<8x128xf32>
    %23 = vector.broadcast %21 : vector<1x128xf32> to vector<8x128xf32>
    %24 = arith.mulf %22, %23 : vector<8x128xf32>
    %25 = vector.extract_strided_slice %19 {offsets = [0, 1], sizes = [8, 1], strides = [1, 1]} : vector<8x128xf32> to vector<8x1xf32>
    %26 = vector.extract_strided_slice %2 {offsets = [1, 0], sizes = [1, 128], strides = [1, 1]} : vector<8x128xf32> to vector<1x128xf32>
    %27 = vector.broadcast %25 : vector<8x1xf32> to vector<8x128xf32>
    %28 = vector.broadcast %26 : vector<1x128xf32> to vector<8x128xf32>
    %29 = arith.mulf %27, %28 : vector<8x128xf32>
    %30 = arith.addf %24, %29 : vector<8x128xf32>
    %31 = vector.extract_strided_slice %19 {offsets = [0, 2], sizes = [8, 1], strides = [1, 1]} : vector<8x128xf32> to vector<8x1xf32>
    %32 = vector.extract_strided_slice %2 {offsets = [2, 0], sizes = [1, 128], strides = [1, 1]} : vector<8x128xf32> to vector<1x128xf32>
    %33 = vector.broadcast %31 : vector<8x1xf32> to vector<8x128xf32>
    %34 = vector.broadcast %32 : vector<1x128xf32> to vector<8x128xf32>
    %35 = arith.mulf %33, %34 : vector<8x128xf32>
    %36 = arith.addf %30, %35 : vector<8x128xf32>
    %c0_5 = arith.constant 0 : index
    %c0_6 = arith.constant 0 : index
    %37 = vector.load %arg3[%c0_5, %c0_6] : memref<8x128xf32, #tpu.memory_space<vmem>>, vector<8x128xf32>
    tpu.vector_store %arg3[%c0_5, %c0_6], %36 {strides = array<i32>} : memref<8x128xf32, #tpu.memory_space<vmem>>, vector<8x128xf32>,
    return
  }
}

</mosaic_0001>

<llo_original>
// kernel: _forward.2
$region0: #{_forward.2}
  #allocation0 [shape = 'u32[]', space=smem, size = 0x4, offset = 0x4, fixed_abs, tag = 'smem constant byte address 0x4 - core index']
  #allocation1 [shape = 'u32[144,128]{1,0:T(1,128)}', space=vmem, size = 0x12000, scoped, tag = 'internal scratch']
  #allocation2 [shape = 'u32[2048]{0}', space=vmem, size = 0x2000, scoped, tag = 'scoped memory for _forward.2']
  #allocation3 [shape = 'u32[2048]{0}', space=vmem, size = 0x2000, scoped, tag = 'scoped memory for _forward.2']
  #allocation4 [shape = 'u32[2048]{0}', space=vmem, size = 0x2000, scoped, tag = 'scoped memory for _forward.2']
  #allocation5 [shape = 'u32[2048]{0}', space=vmem, size = 0x2000, scoped, tag = 'scoped memory for _forward.2']
  #allocation6 [shape = 'u32[2048]{0}', space=vmem, size = 0x2000, scoped, tag = 'scoped memory for _forward.2']
  #allocation7 [shape = 'u32[2048]{0}', space=vmem, size = 0x2000, scoped, tag = 'scoped memory for _forward.2']
  #allocation8 [shape = 'u32[2048]{0}', space=vmem, size = 0x2000, scoped, tag = 'scoped memory for _forward.2']
  #allocation9 [shape = 'u32[2048]{0}', space=vmem, size = 0x2000, scoped, tag = 'scoped memory for _forward.2']
  #allocation10 [shape = 'u32[2048]{0}', space=vmem, size = 0x2000, scoped, tag = 'scoped memory for _forward.2']
  #allocation11 [shape = 'u32[2048]{0}', space=vmem, size = 0x2000, scoped, tag = 'scoped memory for _forward.2']
  #allocation12 [shape = 'u32[2048]{0}', space=vmem, size = 0x2000, scoped, tag = 'scoped memory for _forward.2']
  #allocation13 [shape = 'u32[2048]{0}', space=vmem, size = 0x2000, scoped, tag = 'scoped memory for _forward.2']
  #allocation14 [shape = 'u32[2048]{0}', space=vmem, size = 0x2000, scoped, tag = 'scoped memory for _forward.2']
  #allocation15 [shape = 'u32[2048]{0}', space=vmem, size = 0x2000, scoped, tag = 'scoped memory for _forward.2']
  #allocation16 [shape = 'u32[2048]{0}', space=vmem, size = 0x2000, scoped, tag = 'scoped memory for _forward.2']
  %s0 = inlined_call_operand.vmem [shape: f32[3,3], index: 0, kind: input, shape index: {}]
  %s1 = inlined_call_operand.<no memory space> [shape: f32[], index: 1, kind: input, shape index: {}]
  %s2 = inlined_call_operand.vmem [shape: f32[3,3], index: 2, kind: input, shape index: {}]
  %s3 = inlined_call_operand.vmem [shape: f32[3,3], index: 3, kind: input, shape index: {}]
  %s4 = inlined_call_operand.vmem [shape: f32[8,128], index: 4, kind: output, shape index: {}]
  %s5 = sld [smem:[#allocation0]]
  $region22: #{_forward.2} parent=0
    _
  %s7 = ssub.s32 1, %s5
  %s8 = scalar_select 0, %s7, %s5
  %v9 = vstv %s1
  %v10 = vstv %s1
  %v11 = vstv %s1
  $region1: #{_forward.2} parent=0
    #allocation17 [shape = 'u8[4096]{0}', space=vmem, size = 0x1000, dematerialized = true, scoped, tag = 'FusionAdapter Buffer %fusion.2 = f32[8,128]{1,0:T(8,128)} fusion(%param_2.3, %param_1.5), kind=kLoop, calls=%fused_computation.2.clone, metadata={op_name="jit(_forward)/scatter" stack_frame_id=7}']
    #allocation18 [shape = 'u8[4096]{0}', space=vmem, size = 0x1000, dematerialized = true, scoped, tag = 'FusionAdapter Buffer %fusion.1 = f32[8,128]{1,0:T(8,128)} fusion(%param_0.4, %param_1.5), kind=kLoop, calls=%fused_computation.1.clone, metadata={op_name="jit(_forward)/scatter" stack_frame_id=8}']
    #allocation19 [shape = 'u8[4096]{0}', space=vmem, size = 0x1000, dematerialized = true, scoped, tag = 'FusionAdapter Buffer %fusion.3 = f32[8,128]{1,0:T(8,128)} fusion(%param_3.2, %param_1.5), kind=kLoop, calls=%fused_computation.3.clone, metadata={op_name="jit(_forward)/scatter" stack_frame_id=11}']
    // Predicated region
    $region2: #{_forward.2} parent=1 // pred_check
      _
    $region3: #{_forward.2} parent=1 // pred_check_branch
      %13 = sbr.rel (0) target = $region5
    $region4: #{_forward.2} parent=1 // pred_region
      _
    $region5: #{_forward.2} parent=1 // pred_fallthru
      _
    // Predicated region
    $region6: #{_forward.2} parent=1 // pred_check
      _
    $region7: #{_forward.2} parent=1 // pred_check_branch
      %15 = sbr.rel (0) target = $region9
    $region8: #{_forward.2} parent=1 // pred_region
      _
    $region9: #{_forward.2} parent=1 // pred_fallthru
      _
    // Predicated region
    $region10: #{_forward.2} parent=1 // pred_check
      _
    $region11: #{_forward.2} parent=1 // pred_check_branch
      %17 = sbr.rel (0) target = $region13
    $region12: #{_forward.2} parent=1 // pred_region
      _
    $region13: #{_forward.2} parent=1 // pred_fallthru
      _
    %v18 = vld [vmem:[%s2] sm:$0x7]
    %v19 = vlaneseq
    %v20 = vshrl.u32 %v19, 7
    %vm22 = vcmp.lt.s32.totalorder %v20, 3
    %v23 = vsel %vm22, %v18, %v9
    %v24 = vlaneseq
    %v25 = vand.u32 %v24, 127
    %vm27 = vcmp.lt.s32.totalorder %v25, 3
    %v28 = vsel %vm27, %v23, %v9
    %30 = vst [vmem:[#allocation17] sm:$0xff] %v28
    %v31 = vld [vmem:[%s0] sm:$0x7]
    %v32 = vlaneseq
    %v33 = vshrl.u32 %v32, 7
    %vm35 = vcmp.lt.s32.totalorder %v33, 3
    %v36 = vsel %vm35, %v31, %v10
    %v37 = vlaneseq
    %v38 = vand.u32 %v37, 127
    %vm40 = vcmp.lt.s32.totalorder %v38, 3
    %v41 = vsel %vm40, %v36, %v10
    %43 = vst [vmem:[#allocation18] sm:$0xff] %v41
    %v44 = vld [vmem:[%s3] sm:$0x7]
    %v45 = vlaneseq
    %v46 = vshrl.u32 %v45, 7
    %vm48 = vcmp.lt.s32.totalorder %v46, 3
    %v49 = vsel %vm48, %v44, %v11
    %v50 = vlaneseq
    %v51 = vand.u32 %v50, 127
    %vm53 = vcmp.lt.s32.totalorder %v51, 3
    %v54 = vsel %vm53, %v49, %v11
    %56 = vst [vmem:[#allocation19] sm:$0xff] %v54
    %v57 = vld [vmem:[#allocation17] sm:$0xff]
    %v58 = vld [vmem:[#allocation18] sm:$0xff]
    %v59 = vld [vmem:[#allocation19] sm:$0xff]
    %61 = vset.pattern.permute.xlu0 0
    %62 = vperm.xlu0 %61, %v57
    %v63 = vpop.permute.xlu0 %62
    %v65 = vlaneseq
    %v66 = vshrl.u32 %v65, 7
    %v67 = vsub.s32 0, %v66
    %v68 = vrot.slane %v58, %v67
    %v69 = vmul.f32 %v63, %v68
    %70 = vset.pattern.permute.xlu0 1
    %71 = vperm.xlu0 %70, %v57
    %v72 = vpop.permute.xlu0 %71
    %v74 = vlaneseq
    %v75 = vshrl.u32 %v74, 7
    %v76 = vsub.s32 1, %v75
    %v77 = vrot.slane %v58, %v76
    %v78 = vmul.f32 %v72, %v77
    %v79 = vadd.f32 %v69, %v78
    %80 = vset.pattern.permute.xlu0 2
    %81 = vperm.xlu0 %80, %v57
    %v82 = vpop.permute.xlu0 %81
    %v84 = vlaneseq
    %v85 = vshrl.u32 %v84, 7
    %v86 = vsub.s32 2, %v85
    %v87 = vrot.slane %v58, %v86
    %v88 = vmul.f32 %v82, %v87
    %v89 = vadd.f32 %v79, %v88
    %91 = vset.pattern.permute.xlu0 0
    %92 = vperm.xlu0 %91, %v89
    %v93 = vpop.permute.xlu0 %92
    %v95 = vlaneseq
    %v96 = vshrl.u32 %v95, 7
    %v97 = vsub.s32 0, %v96
    %v98 = vrot.slane %v59, %v97
    %v99 = vmul.f32 %v93, %v98
    %100 = vset.pattern.permute.xlu0 1
    %101 = vperm.xlu0 %100, %v89
    %v102 = vpop.permute.xlu0 %101
    %v104 = vlaneseq
    %v105 = vshrl.u32 %v104, 7
    %v106 = vsub.s32 1, %v105
    %v107 = vrot.slane %v59, %v106
    %v108 = vmul.f32 %v102, %v107
    %v109 = vadd.f32 %v99, %v108
    %110 = vset.pattern.permute.xlu0 2
    %111 = vperm.xlu0 %110, %v89
    %v112 = vpop.permute.xlu0 %111
    %v114 = vlaneseq
    %v115 = vshrl.u32 %v114, 7
    %v116 = vsub.s32 2, %v115
    %v117 = vrot.slane %v59, %v116
    %v118 = vmul.f32 %v112, %v117
    %v119 = vadd.f32 %v109, %v118
    %120 = vst [vmem:[%s4] sm:$0xff] %v119
    // Predicated region
    $region14: #{_forward.2} parent=1 // pred_check
      _
    $region15: #{_forward.2} parent=1 // pred_check_branch
      %122 = sbr.rel (0) target = $region17
    $region16: #{_forward.2} parent=1 // pred_region
      _
    $region17: #{_forward.2} parent=1 // pred_fallthru
      _
    // Predicated region
    $region18: #{_forward.2} parent=1 // pred_check
      _
    $region19: #{_forward.2} parent=1 // pred_check_branch
      %124 = sbr.rel (0) target = $region21
    $region20: #{_forward.2} parent=1 // pred_region
      _
    $region21: #{_forward.2} parent=1 // pred_fallthru
      _

</llo_original>
